<compile_context>
chip_gen: v6e
topology: v6e:2x2x1
jax: 0.10.0
libtpu: 0.0.40
codegen_flags: <defaults>
</compile_context>

<pallas_src>
import functools

import jax
import jax.numpy as jnp
from jax.experimental import pallas as pl
from jax.experimental.pallas import tpu as pltpu

LANE = 128
_NEG_BIG = -1e30  # pad-logit value: exp(pad - max) underflows to exactly 0


def fused_classifier_kernel(x_ref, w_ref, b_ref, y_ref, ysm_ref):
    # x_ref:  [bm, F]    f32 activations (one batch tile); cast to bf16 here
    # w_ref:  [F, NCp]   bf16 fused weight (lane-padded), VMEM-resident
    # b_ref:  [1, NCp]   f32 fused bias (pad lanes = -1e30)
    # y_ref / ysm_ref: [bm, NCp] bf16 lane-dense outputs
    x_bf16 = x_ref[...].astype(jnp.bfloat16)          # VPU cast, hidden (mem-bound)
    y = jnp.dot(x_bf16, w_ref[...], preferred_element_type=jnp.float32)
    y = y + b_ref[...]
    y_ref[...] = y.astype(y_ref.dtype)

    # numerically stable softmax over classes; pad lanes contribute exactly 0
    m = jnp.max(y, axis=1, keepdims=True)
    e = jnp.exp(y - m)                                 # EUP
    denom = jnp.sum(e, axis=1, keepdims=True)
    inv = pl.reciprocal(denom, approx=True)            # EUP, divide off the VALU
    ysm_ref[...] = (e * inv).astype(ysm_ref.dtype)


def prepare_fused_params(wb, bb, wc, bc):
    """One-time parameter fusion (outside the hot path).

    wb: [BNK, F]  bottleneck weight (PyTorch [out, in] layout)
    bb: [BNK]     bottleneck bias
    wc: [NC, BNK] classifier weight
    bc: [NC]      classifier bias
    Returns (w_fused [F, NCp] bf16, b_fused [1, NCp] f32).
    """
    nc = wc.shape[0]
    f = wb.shape[1]
    ncp = max(LANE, ((nc + LANE - 1) // LANE) * LANE)

    # y = (x @ Wb^T + bb) @ Wc^T + bc  ==  x @ (Wb^T Wc^T) + (bb Wc^T + bc)
    w_fused = jnp.dot(wb.T.astype(jnp.float32), wc.T.astype(jnp.float32))     # [F, NC]
    b_fused = jnp.dot(bb.astype(jnp.float32), wc.T.astype(jnp.float32)) + bc  # [NC]

    w_pad = jnp.zeros((f, ncp), jnp.float32).at[:, :nc].set(w_fused)
    b_pad = jnp.full((1, ncp), _NEG_BIG, jnp.float32).at[:, :nc].set(b_fused)
    return w_pad.astype(jnp.bfloat16), b_pad


def _round_up(x, m):
    return ((x + m - 1) // m) * m


def _step_vmem_bytes(bm, f, ncp):
    # double-buffered f32 x tile + pinned bf16 weight/f32 bias
    # + two double-buffered bf16 output tiles
    return (2 * bm * f * 4) + (f * ncp * 2 + ncp * 4) + (2 * 2 * bm * ncp * 2)


def _pick_bm(b, f, ncp, budget_bytes=40 * 1024 * 1024):
    if b <= 16:
        return b  # single tiny tile; block == full array dims is layout-legal
    # aim for >=2 grid steps (v7x: both TensorCores busy), cap at 1024 rows
    bm = min(1024, max(8, _round_up(pl.cdiv(b, 2), 8)))
    # shrink until the per-step VMEM footprint fits the budget (v5e/v7x safe)
    while bm > 8 and _step_vmem_bytes(bm, f, ncp) > budget_bytes:
        bm = max(8, _round_up(bm // 2, 8))
    return bm


@functools.partial(jax.jit, static_argnames=("num_classes",))
def classifier_forward(x_nchw, w_fused, b_fused, num_classes):
    """x_nchw: [B, C, H, W]. Returns (y, y_softmax), each [B, num_classes]."""
    b = x_nchw.shape[0]
    x2d = x_nchw.reshape(b, -1)          # flatten only; stays f32, cast in-kernel
    f = x2d.shape[1]
    ncp = w_fused.shape[1]

    bm = _pick_bm(b, f, ncp)
    grid = (pl.cdiv(b, bm),)

    # Explicit scoped-VMEM limit: covers the per-step footprint + headroom,
    # never below the 32 MiB default nor near v7x's 64 MiB physical ceiling.
    vmem_limit = int(max(32 * 1024 * 1024,
                         _step_vmem_bytes(bm, f, ncp) + 8 * 1024 * 1024))

    cost = pl.CostEstimate(
        flops=2 * b * f * ncp,
        transcendentals=b * ncp,
        bytes_accessed=b * f * 4 + f * ncp * 2 + ncp * 4 + 2 * b * ncp * 2,
    )

    y_pad, ysm_pad = pl.pallas_call(
        fused_classifier_kernel,
        out_shape=(
            jax.ShapeDtypeStruct((b, ncp), jnp.bfloat16),
            jax.ShapeDtypeStruct((b, ncp), jnp.bfloat16),
        ),
        grid=grid,
        in_specs=[
            pl.BlockSpec((bm, f), lambda i: (i, 0)),      # x tile, pipelined
            pl.BlockSpec((f, ncp), lambda i: (0, 0)),     # fused weight, pinned
            pl.BlockSpec((1, ncp), lambda i: (0, 0)),     # fused bias, pinned
        ],
        out_specs=(
            pl.BlockSpec((bm, ncp), lambda i: (i, 0)),
            pl.BlockSpec((bm, ncp), lambda i: (i, 0)),
        ),
        compiler_params=pltpu.CompilerParams(
            dimension_semantics=("parallel",),  # shards batch tiles across v7x TCs
            vmem_limit_bytes=vmem_limit,
        ),
        cost_estimate=cost,
    )(x2d, w_fused, b_fused)

    # NOTE: pad lanes of y_pad carry -1e30; never expose the padded slabs.
    return y_pad[:, :num_classes], ysm_pad[:, :num_classes]


if __name__ == "__main__":
    # Small shapes consistent with the module's forward:
    #   x: [B=2, C=4, H=16, W=16]  ->  feature_dim = 1024
    #   bottleneck = 32, num_classes = 16
    B, C, H, W = 2, 4, 16, 16
    feature_dim = C * H * W
    bottleneck = 32
    num_classes = 16

    key = jax.random.PRNGKey(0)
    kx, kwb, kwc = jax.random.split(key, 3)

    x = jax.random.normal(kx, (B, C, H, W), dtype=jnp.float32)

    # Deterministic parameter init mirroring the PyTorch __init__:
    #   bottleneck.weight ~ N(0, 0.005), bottleneck.bias = 0.1
    #   classifier.weight ~ N(0, 0.01),  classifier.bias = 0.0
    wb = 0.005 * jax.random.normal(kwb, (bottleneck, feature_dim), dtype=jnp.float32)
    bb = jnp.full((bottleneck,), 0.1, dtype=jnp.float32)
    wc = 0.01 * jax.random.normal(kwc, (num_classes, bottleneck), dtype=jnp.float32)
    bc = jnp.zeros((num_classes,), dtype=jnp.float32)

    # One-time fusion (parameter setup time, not per forward call).
    w_fused, b_fused = prepare_fused_params(wb, bb, wc, bc)

    y, y_softmax = classifier_forward(x, w_fused, b_fused, num_classes)
    jax.block_until_ready((y, y_softmax))

    # Sanity check against the pure-JAX f32 two-Linear reference.
    x2d = x.reshape(B, -1)
    h_ref = x2d @ wb.T + bb
    y_ref = h_ref @ wc.T + bc
    ysm_ref = jax.nn.softmax(y_ref, axis=1)

    assert y.shape == (B, num_classes) and y_softmax.shape == (B, num_classes)
    # bf16 matmul inputs/outputs + approx reciprocal: loosened tolerance vs f32 ref.
    assert jnp.allclose(y.astype(jnp.float32), y_ref, atol=1e-3, rtol=1e-2)
    assert jnp.allclose(y_softmax.astype(jnp.float32), ysm_ref, atol=2e-3, rtol=1e-2)

    print("KERNEL_OK")
</pallas_src>

<mosaic_0001>
module attributes {stable_mosaic.version = 11 : i64} {
  func.func @fused_classifier_kernel(%arg0: i32, %arg1: memref<2x1024xf32, #tpu.memory_space<vmem>>, %arg2: memref<1024x128xbf16, #tpu.memory_space<vmem>>, %arg3: memref<1x128xf32, #tpu.memory_space<vmem>>, %arg4: memref<2x128xbf16, #tpu.memory_space<vmem>>, %arg5: memref<2x128xbf16, #tpu.memory_space<vmem>>) attributes {dimension_semantics = [#tpu.dimension_semantics<parallel>], iteration_bounds = array<i64: 1>, scalar_prefetch = 0 : i64, scratch_operands = 0 : i64, tpu.core_type = #tpu.core_type<tc>, window_params = [{transform_indices = @transform_0, window_bounds = array<i64: 2, 1024>}, {pipeline_mode = #tpu.pipeline_mode<synchronous>, transform_indices = @transform_1, window_bounds = array<i64: 1024, 128>}, {pipeline_mode = #tpu.pipeline_mode<synchronous>, transform_indices = @transform_2, window_bounds = array<i64: 1, 128>}, {transform_indices = @transform_3, window_bounds = array<i64: 2, 128>}, {transform_indices = @transform_4, window_bounds = array<i64: 2, 128>}]} {
    %c0 = arith.constant 0 : index
    %c0_0 = arith.constant 0 : index
    %0 = vector.load %arg1[%c0, %c0_0] : memref<2x1024xf32, #tpu.memory_space<vmem>>, vector<2x1024xf32>
    %1 = arith.truncf %0 : vector<2x1024xf32> to vector<2x1024xbf16>
    %c0_1 = arith.constant 0 : index
    %c0_2 = arith.constant 0 : index
    %2 = vector.load %arg2[%c0_1, %c0_2] : memref<1024x128xbf16, #tpu.memory_space<vmem>>, vector<1024x128xbf16>
    %cst = arith.constant dense<0.000000e+00> : vector<2x128xf32>
    %3 = tpu.matmul %1, %2, %cst {dimension_numbers = #tpu.dot_dimension_numbers<[1], [0], [0], [1], [0, 0, 1, 1], [], []>} : vector<2x1024xbf16>, vector<1024x128xbf16>, vector<2x128xf32> -> vector<2x128xf32>
    %c0_3 = arith.constant 0 : index
    %c0_4 = arith.constant 0 : index
    %4 = vector.load %arg3[%c0_3, %c0_4] : memref<1x128xf32, #tpu.memory_space<vmem>>, vector<1x128xf32>
    %5 = vector.broadcast %4 : vector<1x128xf32> to vector<2x128xf32>
    %6 = arith.addf %3, %5 : vector<2x128xf32>
    %7 = arith.truncf %6 : vector<2x128xf32> to vector<2x128xbf16>
    %c0_5 = arith.constant 0 : index
    %c0_6 = arith.constant 0 : index
    %8 = vector.load %arg4[%c0_5, %c0_6] : memref<2x128xbf16, #tpu.memory_space<vmem>>, vector<2x128xbf16>
    tpu.vector_store %arg4[%c0_5, %c0_6], %7 {strides = array<i32>} : memref<2x128xbf16, #tpu.memory_space<vmem>>, vector<2x128xbf16>,
    %cst_7 = arith.constant dense<0xFF800000> : vector<2xf32>
    %9 = vector.multi_reduction <maximumf>, %6, %cst_7 [1] : vector<2x128xf32> to vector<2xf32>
    %10 = vector.shape_cast %9 : vector<2xf32> to vector<2x1xf32>
    %11 = vector.broadcast %10 : vector<2x1xf32> to vector<2x128xf32>
    %12 = arith.subf %6, %11 : vector<2x128xf32>
    %13 = math.exp %12 : vector<2x128xf32>
    %cst_8 = arith.constant dense<0.000000e+00> : vector<2xf32>
    %14 = vector.multi_reduction <add>, %13, %cst_8 [1] : vector<2x128xf32> to vector<2xf32>
    %15 = vector.shape_cast %14 : vector<2xf32> to vector<2x1xf32>
    %16 = tpu.reciprocal %15 {approx = true} : vector<2x1xf32> -> vector<2x1xf32>
    %17 = vector.broadcast %16 : vector<2x1xf32> to vector<2x128xf32>
    %18 = arith.mulf %13, %17 : vector<2x128xf32>
    %19 = arith.truncf %18 : vector<2x128xf32> to vector<2x128xbf16>
    %c0_9 = arith.constant 0 : index
    %c0_10 = arith.constant 0 : index
    %20 = vector.load %arg5[%c0_9, %c0_10] : memref<2x128xbf16, #tpu.memory_space<vmem>>, vector<2x128xbf16>
    tpu.vector_store %arg5[%c0_9, %c0_10], %19 {strides = array<i32>} : memref<2x128xbf16, #tpu.memory_space<vmem>>, vector<2x128xbf16>,
    return
  }
  func.func @transform_0(%arg0: i32) -> (i32, i32) {
    %c0_i32 = arith.constant 0 : i32
    %c0_i32_0 = arith.constant 0 : i32
    return %arg0, %c0_i32 : i32, i32
  }
  func.func @transform_1(%arg0: i32) -> (i32, i32) {
    %c0_i32 = arith.constant 0 : i32
    %c0_i32_0 = arith.constant 0 : i32
    %c0_i32_1 = arith.constant 0 : i32
    return %c0_i32, %c0_i32_0 : i32, i32
  }
  func.func @transform_2(%arg0: i32) -> (i32, i32) {
    %c0_i32 = arith.constant 0 : i32
    %c0_i32_0 = arith.constant 0 : i32
    %c0_i32_1 = arith.constant 0 : i32
    return %c0_i32, %c0_i32_0 : i32, i32
  }
  func.func @transform_3(%arg0: i32) -> (i32, i32) {
    %c0_i32 = arith.constant 0 : i32
    %c0_i32_0 = arith.constant 0 : i32
    return %arg0, %c0_i32 : i32, i32
  }
  func.func @transform_4(%arg0: i32) -> (i32, i32) {
    %c0_i32 = arith.constant 0 : i32
    %c0_i32_0 = arith.constant 0 : i32
    return %arg0, %c0_i32 : i32, i32
  }
}

</mosaic_0001>

<llo_original>
// kernel: classifier_forward.1
$region0: #{classifier_forward.1}
  #allocation0 [shape = 'u32[]', space=smem, size = 0x4, offset = 0x4, fixed_abs, tag = 'smem constant byte address 0x4 - core index']
  #allocation1 [shape = 'u32[144,128]{1,0:T(1,128)}', space=vmem, size = 0x12000, scoped, tag = 'internal scratch']
  %s0 = inlined_call_operand.vmem [shape: f32[2,1024], index: 0, kind: input, shape index: {}]
  %s1 = inlined_call_operand.hbm [shape: bf16[1024,128], index: 1, kind: input, shape index: {}]
  %s2 = inlined_call_operand.vmem [shape: f32[1,128], index: 2, kind: input, shape index: {}]
  %s3 = inlined_call_operand.hbm [shape: bf16[2,128], index: 3, kind: output, shape index: {0}]
  %s4 = inlined_call_operand.hbm [shape: bf16[2,128], index: 4, kind: output, shape index: {1}]
  %5 = xla_tuple %s3, %s4
  %s6 = sld [smem:[#allocation0]]
  $region34: #{classifier_forward.1} parent=0
    _
  %s8 = ssub.s32 1, %s6
  %s9 = scalar_select 0, %s8, %s6
  $region1: #{classifier_forward.1} parent=0
    #allocation2 [shape = 'u8[262144]{0}', space=vmem, size = 0x40000, scoped, tag = 'input window, operand 1, single buffered']
    #allocation3 [shape = 's32[1]{0}', space=sflag, size = 0x4, scoped, tag = 'scoped memory for classifier_forward.1']
    #allocation4 [shape = 's32[1]{0}', space=sflag, size = 0x4, scoped, tag = 'scoped memory for classifier_forward.1']
    #allocation5 [shape = 'u8[512]{0}', space=vmem, size = 0x400, scoped, tag = 'output window, operand 0, single buffered']
    #allocation6 [shape = 'u8[512]{0}', space=vmem, size = 0x400, scoped, tag = 'output window, operand 1, single buffered']
    #allocation7 [shape = 's32[1]{0}', space=sflag, size = 0x4, scoped, tag = 'scoped memory for classifier_forward.1']
    %10 = vsyncpa [#allocation3], 0
    %11 = vsyncpa [#allocation4], 0
    %12 = vsyncpa [#allocation7], 0
    // Predicated region
    $region2: #{classifier_forward.1} parent=1 // pred_check
      _
    $region3: #{classifier_forward.1} parent=1 // pred_check_branch
      %14 = sbr.rel (0) target = $region5
    $region4: #{classifier_forward.1} parent=1 // pred_region
      _
    $region5: #{classifier_forward.1} parent=1 // pred_fallthru
      _
    // Predicated region
    $region6: #{classifier_forward.1} parent=1 // pred_check
      _
    $region7: #{classifier_forward.1} parent=1 // pred_check_branch
      %16 = sbr.rel (0) target = $region9
    $region8: #{classifier_forward.1} parent=1 // pred_region
      %s18 = ssub.s32 8192, 8192
      %19 = vsyncadd [#allocation3], %s18
      %s20 = sshll.u32 [#allocation2], 4
      %s21 = int_to_ptr.vmem [resolvable:$true] %s20
      %26 = dma.hbm_to_vmem [thread:$0]  %s1, 8192, %s21, [#allocation3], 64, 64, 4
    $region9: #{classifier_forward.1} parent=1 // pred_fallthru
      _
    // Predicated region
    $region10: #{classifier_forward.1} parent=1 // pred_check
      _
    $region11: #{classifier_forward.1} parent=1 // pred_check_branch
      %28 = sbr.rel (0) target = $region13
    $region12: #{classifier_forward.1} parent=1 // pred_region
      _
    $region13: #{classifier_forward.1} parent=1 // pred_fallthru
      _
    // Predicated region
    $region14: #{classifier_forward.1} parent=1 // pred_check
      _
    $region15: #{classifier_forward.1} parent=1 // pred_check_branch
      %30 = sbr.rel (0) target = $region17
    $region16: #{classifier_forward.1} parent=1 // pred_region
      %31 = dma.done [#allocation3], 8192
    $region17: #{classifier_forward.1} parent=1 // pred_fallthru
      _
    %v33 = vld [vmem:[%s0] sm:$0xff]
    %v34 = vld [vmem:[%s0 + $0x8] sm:$0xff]
    %v37 = vcombine.high %v33, %v33
    %v39 = vunpack.c.l.s4 1983009808
    %v40 = vunpack.c.0.s8 %v39
    %v41 = vlaneseq
    %v42 = vshrl.u32 %v41, 7
    %v43 = vsub.s32 %v40, %v42
    %v44 = vrot.slane %v33, %v43
    %v46 = vunpack.c.l.s4 1983009808
    %v47 = vunpack.c.0.s8 %v46
    %v48 = vlaneseq
    %v49 = vshrl.u32 %v48, 7
    %v50 = vsub.s32 %v47, %v49
    %v51 = vrot.slane %v37, %v50
    %v52 = vcombine.high %v44, %v44
    %v53 = vcombine.high %v51, %v51
    %v54 = vcombine.high %v34, %v34
    %v56 = vunpack.c.l.s4 1983009808
    %v57 = vunpack.c.0.s8 %v56
    %v58 = vlaneseq
    %v59 = vshrl.u32 %v58, 7
    %v60 = vsub.s32 %v57, %v59
    %v61 = vrot.slane %v34, %v60
    %v63 = vunpack.c.l.s4 1983009808
    %v64 = vunpack.c.0.s8 %v63
    %v65 = vlaneseq
    %v66 = vshrl.u32 %v65, 7
    %v67 = vsub.s32 %v64, %v66
    %v68 = vrot.slane %v54, %v67
    %v69 = vcombine.high %v61, %v61
    %v70 = vcombine.high %v68, %v68
    %v79 = vpack.c.bf16 %v44, %v44
    %v80 = vpack.c.bf16 %v52, %v52
    %v81 = vpack.c.bf16 %v51, %v51
    %v82 = vpack.c.bf16 %v53, %v53
    %v83 = vpack.c.bf16 %v61, %v61
    %v84 = vpack.c.bf16 %v69, %v69
    %v85 = vpack.c.bf16 %v68, %v68
    %v86 = vpack.c.bf16 %v70, %v70
    %v87 = vld [vmem:[#allocation2] sm:$0xf]
    %v88 = vld [vmem:[#allocation2 + $0x4] sm:$0xf]
    %v89 = vld [vmem:[#allocation2 + $0x8] sm:$0xf]
    %v90 = vld [vmem:[#allocation2 + $0xc] sm:$0xf]
    %v91 = vld [vmem:[#allocation2 + $0x10] sm:$0xf]
    %v92 = vld [vmem:[#allocation2 + $0x14] sm:$0xf]
    %v93 = vld [vmem:[#allocation2 + $0x18] sm:$0xf]
    %v94 = vld [vmem:[#allocation2 + $0x1c] sm:$0xf]
    %v95 = vld [vmem:[#allocation2 + $0x20] sm:$0xf]
    %v96 = vld [vmem:[#allocation2 + $0x24] sm:$0xf]
    %v97 = vld [vmem:[#allocation2 + $0x28] sm:$0xf]
    %v98 = vld [vmem:[#allocation2 + $0x2c] sm:$0xf]
    %v99 = vld [vmem:[#allocation2 + $0x30] sm:$0xf]
    %v100 = vld [vmem:[#allocation2 + $0x34] sm:$0xf]
    %v101 = vld [vmem:[#allocation2 + $0x38] sm:$0xf]
    %v102 = vld [vmem:[#allocation2 + $0x3c] sm:$0xf]
    %v103 = vld [vmem:[#allocation2 + $0x40] sm:$0xf]
    %v104 = vld [vmem:[#allocation2 + $0x44] sm:$0xf]
    %v105 = vld [vmem:[#allocation2 + $0x48] sm:$0xf]
    %v106 = vld [vmem:[#allocation2 + $0x4c] sm:$0xf]
    %v107 = vld [vmem:[#allocation2 + $0x50] sm:$0xf]
    %v108 = vld [vmem:[#allocation2 + $0x54] sm:$0xf]
    %v109 = vld [vmem:[#allocation2 + $0x58] sm:$0xf]
    %v110 = vld [vmem:[#allocation2 + $0x5c] sm:$0xf]
    %v111 = vld [vmem:[#allocation2 + $0x60] sm:$0xf]
    %v112 = vld [vmem:[#allocation2 + $0x64] sm:$0xf]
    %v113 = vld [vmem:[#allocation2 + $0x68] sm:$0xf]
    %v114 = vld [vmem:[#allocation2 + $0x6c] sm:$0xf]
    %v115 = vld [vmem:[#allocation2 + $0x70] sm:$0xf]
    %v116 = vld [vmem:[#allocation2 + $0x74] sm:$0xf]
    %v117 = vld [vmem:[#allocation2 + $0x78] sm:$0xf]
    %v118 = vld [vmem:[#allocation2 + $0x7c] sm:$0xf]
    %v119 = vld [vmem:[#allocation2 + $0x80] sm:$0xf]
    %v120 = vld [vmem:[#allocation2 + $0x84] sm:$0xf]
    %v121 = vld [vmem:[#allocation2 + $0x88] sm:$0xf]
    %v122 = vld [vmem:[#allocation2 + $0x8c] sm:$0xf]
    %v123 = vld [vmem:[#allocation2 + $0x90] sm:$0xf]
    %v124 = vld [vmem:[#allocation2 + $0x94] sm:$0xf]
    %v125 = vld [vmem:[#allocation2 + $0x98] sm:$0xf]
    %v126 = vld [vmem:[#allocation2 + $0x9c] sm:$0xf]
    %v127 = vld [vmem:[#allocation2 + $0xa0] sm:$0xf]
    %v128 = vld [vmem:[#allocation2 + $0xa4] sm:$0xf]
    %v129 = vld [vmem:[#allocation2 + $0xa8] sm:$0xf]
    %v130 = vld [vmem:[#allocation2 + $0xac] sm:$0xf]
    %v131 = vld [vmem:[#allocation2 + $0xb0] sm:$0xf]
    %v132 = vld [vmem:[#allocation2 + $0xb4] sm:$0xf]
    %v133 = vld [vmem:[#allocation2 + $0xb8] sm:$0xf]
    %v134 = vld [vmem:[#allocation2 + $0xbc] sm:$0xf]
    %v135 = vld [vmem:[#allocation2 + $0xc0] sm:$0xf]
    %v136 = vld [vmem:[#allocation2 + $0xc4] sm:$0xf]
    %v137 = vld [vmem:[#allocation2 + $0xc8] sm:$0xf]
    %v138 = vld [vmem:[#allocation2 + $0xcc] sm:$0xf]
    %v139 = vld [vmem:[#allocation2 + $0xd0] sm:$0xf]
    %v140 = vld [vmem:[#allocation2 + $0xd4] sm:$0xf]
    %v141 = vld [vmem:[#allocation2 + $0xd8] sm:$0xf]
    %v142 = vld [vmem:[#allocation2 + $0xdc] sm:$0xf]
    %v143 = vld [vmem:[#allocation2 + $0xe0] sm:$0xf]
    %v144 = vld [vmem:[#allocation2 + $0xe4] sm:$0xf]
    %v145 = vld [vmem:[#allocation2 + $0xe8] sm:$0xf]
    %v146 = vld [vmem:[#allocation2 + $0xec] sm:$0xf]
    %v147 = vld [vmem:[#allocation2 + $0xf0] sm:$0xf]
    %v148 = vld [vmem:[#allocation2 + $0xf4] sm:$0xf]
    %v149 = vld [vmem:[#allocation2 + $0xf8] sm:$0xf]
    %v150 = vld [vmem:[#allocation2 + $0xfc] sm:$0xf]
    %v151 = vld [vmem:[#allocation2 + $0x100] sm:$0xf]
    %v152 = vld [vmem:[#allocation2 + $0x104] sm:$0xf]
    %v153 = vld [vmem:[#allocation2 + $0x108] sm:$0xf]
    %v154 = vld [vmem:[#allocation2 + $0x10c] sm:$0xf]
    %v155 = vld [vmem:[#allocation2 + $0x110] sm:$0xf]
    %v156 = vld [vmem:[#allocation2 + $0x114] sm:$0xf]
    %v157 = vld [vmem:[#allocation2 + $0x118] sm:$0xf]
    %v158 = vld [vmem:[#allocation2 + $0x11c] sm:$0xf]
    %v159 = vld [vmem:[#allocation2 + $0x120] sm:$0xf]
    %v160 = vld [vmem:[#allocation2 + $0x124] sm:$0xf]
    %v161 = vld [vmem:[#allocation2 + $0x128] sm:$0xf]
    %v162 = vld [vmem:[#allocation2 + $0x12c] sm:$0xf]
    %v163 = vld [vmem:[#allocation2 + $0x130] sm:$0xf]
    %v164 = vld [vmem:[#allocation2 + $0x134] sm:$0xf]
    %v165 = vld [vmem:[#allocation2 + $0x138] sm:$0xf]
    %v166 = vld [vmem:[#allocation2 + $0x13c] sm:$0xf]
    %v167 = vld [vmem:[#allocation2 + $0x140] sm:$0xf]
    %v168 = vld [vmem:[#allocation2 + $0x144] sm:$0xf]
    %v169 = vld [vmem:[#allocation2 + $0x148] sm:$0xf]
    %v170 = vld [vmem:[#allocation2 + $0x14c] sm:$0xf]
    %v171 = vld [vmem:[#allocation2 + $0x150] sm:$0xf]
    %v172 = vld [vmem:[#allocation2 + $0x154] sm:$0xf]
    %v173 = vld [vmem:[#allocation2 + $0x158] sm:$0xf]
    %v174 = vld [vmem:[#allocation2 + $0x15c] sm:$0xf]
    %v175 = vld [vmem:[#allocation2 + $0x160] sm:$0xf]
    %v176 = vld [vmem:[#allocation2 + $0x164] sm:$0xf]
    %v177 = vld [vmem:[#allocation2 + $0x168] sm:$0xf]
    %v178 = vld [vmem:[#allocation2 + $0x16c] sm:$0xf]
    %v179 = vld [vmem:[#allocation2 + $0x170] sm:$0xf]
    %v180 = vld [vmem:[#allocation2 + $0x174] sm:$0xf]
    %v181 = vld [vmem:[#allocation2 + $0x178] sm:$0xf]
    %v182 = vld [vmem:[#allocation2 + $0x17c] sm:$0xf]
    %v183 = vld [vmem:[#allocation2 + $0x180] sm:$0xf]
    %v184 = vld [vmem:[#allocation2 + $0x184] sm:$0xf]
    %v185 = vld [vmem:[#allocation2 + $0x188] sm:$0xf]
    %v186 = vld [vmem:[#allocation2 + $0x18c] sm:$0xf]
    %v187 = vld [vmem:[#allocation2 + $0x190] sm:$0xf]
    %v188 = vld [vmem:[#allocation2 + $0x194] sm:$0xf]
    %v189 = vld [vmem:[#allocation2 + $0x198] sm:$0xf]
    %v190 = vld [vmem:[#allocation2 + $0x19c] sm:$0xf]
    %v191 = vld [vmem:[#allocation2 + $0x1a0] sm:$0xf]
    %v192 = vld [vmem:[#allocation2 + $0x1a4] sm:$0xf]
    %v193 = vld [vmem:[#allocation2 + $0x1a8] sm:$0xf]
    %v194 = vld [vmem:[#allocation2 + $0x1ac] sm:$0xf]
    %v195 = vld [vmem:[#allocation2 + $0x1b0] sm:$0xf]
    %v196 = vld [vmem:[#allocation2 + $0x1b4] sm:$0xf]
    %v197 = vld [vmem:[#allocation2 + $0x1b8] sm:$0xf]
    %v198 = vld [vmem:[#allocation2 + $0x1bc] sm:$0xf]
    %v199 = vld [vmem:[#allocation2 + $0x1c0] sm:$0xf]
    %v200 = vld [vmem:[#allocation2 + $0x1c4] sm:$0xf]
    %v201 = vld [vmem:[#allocation2 + $0x1c8] sm:$0xf]
    %v202 = vld [vmem:[#allocation2 + $0x1cc] sm:$0xf]
    %v203 = vld [vmem:[#allocation2 + $0x1d0] sm:$0xf]
    %v204 = vld [vmem:[#allocation2 + $0x1d4] sm:$0xf]
    %v205 = vld [vmem:[#allocation2 + $0x1d8] sm:$0xf]
    %v206 = vld [vmem:[#allocation2 + $0x1dc] sm:$0xf]
    %v207 = vld [vmem:[#allocation2 + $0x1e0] sm:$0xf]
    %v208 = vld [vmem:[#allocation2 + $0x1e4] sm:$0xf]
    %v209 = vld [vmem:[#allocation2 + $0x1e8] sm:$0xf]
    %v210 = vld [vmem:[#allocation2 + $0x1ec] sm:$0xf]
    %v211 = vld [vmem:[#allocation2 + $0x1f0] sm:$0xf]
    %v212 = vld [vmem:[#allocation2 + $0x1f4] sm:$0xf]
    %v213 = vld [vmem:[#allocation2 + $0x1f8] sm:$0xf]
    %v214 = vld [vmem:[#allocation2 + $0x1fc] sm:$0xf]
    %v215 = vld [vmem:[%s2] sm:$0x1]
    %v217 = vlaneseq
    %v218 = vshrl.u32 %v217, 7
    %v219 = vsub.s32 0, %v218
    %v220 = vrot.slane %v215, %v219
    %v350 = vunpack.c.l.b16 %v87
    %v351 = vunpack.c.l.b16 %v88
    %v352 = vunpack.c.l.b16 %v89
    %v353 = vunpack.c.l.b16 %v90
    %v354 = vunpack.c.l.b16 %v91
    %v355 = vunpack.c.l.b16 %v92
    %v356 = vunpack.c.l.b16 %v93
    %v357 = vunpack.c.l.b16 %v94
    %v358 = vunpack.c.l.b16 %v95
    %v359 = vunpack.c.l.b16 %v96
    %v360 = vunpack.c.l.b16 %v97
    %v361 = vunpack.c.l.b16 %v98
    %v362 = vunpack.c.l.b16 %v99
    %v363 = vunpack.c.l.b16 %v100
    %v364 = vunpack.c.l.b16 %v101
    %v365 = vunpack.c.l.b16 %v102
    %v366 = vunpack.c.l.b16 %v103
    %v367 = vunpack.c.l.b16 %v104
    %v368 = vunpack.c.l.b16 %v105
    %v369 = vunpack.c.l.b16 %v106
    %v370 = vunpack.c.l.b16 %v107
    %v371 = vunpack.c.l.b16 %v108
    %v372 = vunpack.c.l.b16 %v109
    %v373 = vunpack.c.l.b16 %v110
    %v374 = vunpack.c.l.b16 %v111
    %v375 = vunpack.c.l.b16 %v112
    %v376 = vunpack.c.l.b16 %v113
    %v377 = vunpack.c.l.b16 %v114
    %v378 = vunpack.c.l.b16 %v115
    %v379 = vunpack.c.l.b16 %v116
    %v380 = vunpack.c.l.b16 %v117
    %v381 = vunpack.c.l.b16 %v118
    %v382 = vunpack.c.l.b16 %v119
    %v383 = vunpack.c.l.b16 %v120
    %v384 = vunpack.c.l.b16 %v121
    %v385 = vunpack.c.l.b16 %v122
    %v386 = vunpack.c.l.b16 %v123
    %v387 = vunpack.c.l.b16 %v124
    %v388 = vunpack.c.l.b16 %v125
    %v389 = vunpack.c.l.b16 %v126
    %v390 = vunpack.c.l.b16 %v127
    %v391 = vunpack.c.l.b16 %v128
    %v392 = vunpack.c.l.b16 %v129
    %v393 = vunpack.c.l.b16 %v130
    %v394 = vunpack.c.l.b16 %v131
    %v395 = vunpack.c.l.b16 %v132
    %v396 = vunpack.c.l.b16 %v133
    %v397 = vunpack.c.l.b16 %v134
    %v398 = vunpack.c.l.b16 %v135
    %v399 = vunpack.c.l.b16 %v136
    %v400 = vunpack.c.l.b16 %v137
    %v401 = vunpack.c.l.b16 %v138
    %v402 = vunpack.c.l.b16 %v139
    %v403 = vunpack.c.l.b16 %v140
    %v404 = vunpack.c.l.b16 %v141
    %v405 = vunpack.c.l.b16 %v142
    %v406 = vunpack.c.l.b16 %v143
    %v407 = vunpack.c.l.b16 %v144
    %v408 = vunpack.c.l.b16 %v145
    %v409 = vunpack.c.l.b16 %v146
    %v410 = vunpack.c.l.b16 %v147
    %v411 = vunpack.c.l.b16 %v148
    %v412 = vunpack.c.l.b16 %v149
    %v413 = vunpack.c.l.b16 %v150
    %v414 = vunpack.c.l.b16 %v151
    %v415 = vunpack.c.l.b16 %v152
    %v416 = vunpack.c.l.b16 %v153
    %v417 = vunpack.c.l.b16 %v154
    %v418 = vunpack.c.l.b16 %v155
    %v419 = vunpack.c.l.b16 %v156
    %v420 = vunpack.c.l.b16 %v157
    %v421 = vunpack.c.l.b16 %v158
    %v422 = vunpack.c.l.b16 %v159
    %v423 = vunpack.c.l.b16 %v160
    %v424 = vunpack.c.l.b16 %v161
    %v425 = vunpack.c.l.b16 %v162
    %v426 = vunpack.c.l.b16 %v163
    %v427 = vunpack.c.l.b16 %v164
    %v428 = vunpack.c.l.b16 %v165
    %v429 = vunpack.c.l.b16 %v166
    %v430 = vunpack.c.l.b16 %v167
    %v431 = vunpack.c.l.b16 %v168
    %v432 = vunpack.c.l.b16 %v169
    %v433 = vunpack.c.l.b16 %v170
    %v434 = vunpack.c.l.b16 %v171
    %v435 = vunpack.c.l.b16 %v172
    %v436 = vunpack.c.l.b16 %v173
    %v437 = vunpack.c.l.b16 %v174
    %v438 = vunpack.c.l.b16 %v175
    %v439 = vunpack.c.l.b16 %v176
    %v440 = vunpack.c.l.b16 %v177
    %v441 = vunpack.c.l.b16 %v178
    %v442 = vunpack.c.l.b16 %v179
    %v443 = vunpack.c.l.b16 %v180
    %v444 = vunpack.c.l.b16 %v181
    %v445 = vunpack.c.l.b16 %v182
    %v446 = vunpack.c.l.b16 %v183
    %v447 = vunpack.c.l.b16 %v184
    %v448 = vunpack.c.l.b16 %v185
    %v449 = vunpack.c.l.b16 %v186
    %v450 = vunpack.c.l.b16 %v187
    %v451 = vunpack.c.l.b16 %v188
    %v452 = vunpack.c.l.b16 %v189
    %v453 = vunpack.c.l.b16 %v190
    %v454 = vunpack.c.l.b16 %v191
    %v455 = vunpack.c.l.b16 %v192
    %v456 = vunpack.c.l.b16 %v193
    %v457 = vunpack.c.l.b16 %v194
    %v458 = vunpack.c.l.b16 %v195
    %v459 = vunpack.c.l.b16 %v196
    %v460 = vunpack.c.l.b16 %v197
    %v461 = vunpack.c.l.b16 %v198
    %v462 = vunpack.c.l.b16 %v199
    %v463 = vunpack.c.l.b16 %v200
    %v464 = vunpack.c.l.b16 %v201
    %v465 = vunpack.c.l.b16 %v202
    %v466 = vunpack.c.l.b16 %v203
    %v467 = vunpack.c.l.b16 %v204
    %v468 = vunpack.c.l.b16 %v205
    %v469 = vunpack.c.l.b16 %v206
    %v470 = vunpack.c.l.b16 %v207
    %v471 = vunpack.c.l.b16 %v208
    %v472 = vunpack.c.l.b16 %v209
    %v473 = vunpack.c.l.b16 %v210
    %v474 = vunpack.c.l.b16 %v211
    %v475 = vunpack.c.l.b16 %v212
    %v476 = vunpack.c.l.b16 %v213
    %v477 = vunpack.c.l.b16 %v214
    %v478 = vpack.c.b16 %v351, %v350
    %v479 = vpack.c.b16 %v353, %v352
    %v480 = vpack.c.b16 %v355, %v354
    %v481 = vpack.c.b16 %v357, %v356
    %v482 = vpack.c.b16 %v359, %v358
    %v483 = vpack.c.b16 %v361, %v360
    %v484 = vpack.c.b16 %v363, %v362
    %v485 = vpack.c.b16 %v365, %v364
    %v486 = vpack.c.b16 %v367, %v366
    %v487 = vpack.c.b16 %v369, %v368
    %v488 = vpack.c.b16 %v371, %v370
    %v489 = vpack.c.b16 %v373, %v372
    %v490 = vpack.c.b16 %v375, %v374
    %v491 = vpack.c.b16 %v377, %v376
    %v492 = vpack.c.b16 %v379, %v378
    %v493 = vpack.c.b16 %v381, %v380
    %v494 = vpack.c.b16 %v383, %v382
    %v495 = vpack.c.b16 %v385, %v384
    %v496 = vpack.c.b16 %v387, %v386
    %v497 = vpack.c.b16 %v389, %v388
    %v498 = vpack.c.b16 %v391, %v390
    %v499 = vpack.c.b16 %v393, %v392
    %v500 = vpack.c.b16 %v395, %v394
    %v501 = vpack.c.b16 %v397, %v396
    %v502 = vpack.c.b16 %v399, %v398
    %v503 = vpack.c.b16 %v401, %v400
    %v504 = vpack.c.b16 %v403, %v402
    %v505 = vpack.c.b16 %v405, %v404
    %v506 = vpack.c.b16 %v407, %v406
    %v507 = vpack.c.b16 %v409, %v408
    %v508 = vpack.c.b16 %v411, %v410
    %v509 = vpack.c.b16 %v413, %v412
    %v510 = vpack.c.b16 %v415, %v414
    %v511 = vpack.c.b16 %v417, %v416
    %v512 = vpack.c.b16 %v419, %v418
    %v513 = vpack.c.b16 %v421, %v420
    %v514 = vpack.c.b16 %v423, %v422
    %v515 = vpack.c.b16 %v425, %v424
    %v516 = vpack.c.b16 %v427, %v426
    %v517 = vpack.c.b16 %v429, %v428
    %v518 = vpack.c.b16 %v431, %v430
    %v519 = vpack.c.b16 %v433, %v432
    %v520 = vpack.c.b16 %v435, %v434
    %v521 = vpack.c.b16 %v437, %v436
    %v522 = vpack.c.b16 %v439, %v438
    %v523 = vpack.c.b16 %v441, %v440
    %v524 = vpack.c.b16 %v443, %v442
    %v525 = vpack.c.b16 %v445, %v444
    %v526 = vpack.c.b16 %v447, %v446
    %v527 = vpack.c.b16 %v449, %v448
    %v528 = vpack.c.b16 %v451, %v450
    %v529 = vpack.c.b16 %v453, %v452
    %v530 = vpack.c.b16 %v455, %v454
    %v531 = vpack.c.b16 %v457, %v456
    %v532 = vpack.c.b16 %v459, %v458
    %v533 = vpack.c.b16 %v461, %v460
    %v534 = vpack.c.b16 %v463, %v462
    %v535 = vpack.c.b16 %v465, %v464
    %v536 = vpack.c.b16 %v467, %v466
    %v537 = vpack.c.b16 %v469, %v468
    %v538 = vpack.c.b16 %v471, %v470
    %v539 = vpack.c.b16 %v473, %v472
    %v540 = vpack.c.b16 %v475, %v474
    %v541 = vpack.c.b16 %v477, %v476
    %606 = vmatprep.subr.bf16.mxu0 0
    %607 = vmatpush1.bf16.msra.mxu0 %v485
    %608 = vmatprep.subr.bf16.mxu0 0
    %609 = vmatpush1.bf16.msra.mxu0 %v484
    %610 = vmatprep.subr.bf16.mxu0 0
    %611 = vmatpush1.bf16.msra.mxu0 %v483
    %612 = vmatprep.subr.bf16.mxu0 0
    %613 = vmatpush1.bf16.msra.mxu0 %v482
    %614 = vmatprep.subr.bf16.mxu0 0
    %615 = vmatpush1.bf16.msra.mxu0 %v481
    %616 = vmatprep.subr.bf16.mxu0 0
    %617 = vmatpush1.bf16.msra.mxu0 %v480
    %618 = vmatprep.subr.bf16.mxu0 0
    %619 = vmatpush1.bf16.msra.mxu0 %v479
    %620 = vmatprep.subr.bf16.mxu0 0
    %621 = vmatpush1.bf16.msra.mxu0 %v478
    %622 = vmatprep.subr.bf16.mxu0 0
    %623 = vmatpush2.bf16.msra.mxu0 %v493
    %624 = vmatprep.subr.bf16.mxu0 0
    %625 = vmatpush2.bf16.msra.mxu0 %v492
    %626 = vmatprep.subr.bf16.mxu0 0
    %627 = vmatpush2.bf16.msra.mxu0 %v491
    %628 = vmatprep.subr.bf16.mxu0 0
    %629 = vmatpush2.bf16.msra.mxu0 %v490
    %630 = vmatprep.subr.bf16.mxu0 0
    %631 = vmatpush2.bf16.msra.mxu0 %v489
    %632 = vmatprep.subr.bf16.mxu0 0
    %633 = vmatpush2.bf16.msra.mxu0 %v488
    %634 = vmatprep.subr.bf16.mxu0 0
    %635 = vmatpush2.bf16.msra.mxu0 %v487
    %636 = vmatprep.subr.bf16.mxu0 0
    %637 = vmatpush2.bf16.msra.mxu0 %v486
    %638 = vmatprep.mubr.bf16.mxu0 %v80
    %639 = vmatmul.mubr.bf16.gmra.mxu0 %v79
    %v640 = vpop.f32.mrf.mxu0
    %v641 = vadd.f32 %v220, %v640
    %v642 = vpop.f32.mrf.mxu0
    %v643 = vpop.f32.mrf.mxu0
    %v644 = vpop.f32.mrf.mxu0
    %645 = vdwg.mxu0
    %646 = vmatprep.subr.bf16.mxu0 0
    %647 = vmatpush1.bf16.msra.mxu0 %v501
    %648 = vmatprep.subr.bf16.mxu0 0
    %649 = vmatpush1.bf16.msra.mxu0 %v500
    %650 = vmatprep.subr.bf16.mxu0 0
    %651 = vmatpush1.bf16.msra.mxu0 %v499
    %652 = vmatprep.subr.bf16.mxu0 0
    %653 = vmatpush1.bf16.msra.mxu0 %v498
    %654 = vmatprep.subr.bf16.mxu0 0
    %655 = vmatpush1.bf16.msra.mxu0 %v497
    %656 = vmatprep.subr.bf16.mxu0 0
    %657 = vmatpush1.bf16.msra.mxu0 %v496
    %658 = vmatprep.subr.bf16.mxu0 0
    %659 = vmatpush1.bf16.msra.mxu0 %v495
    %660 = vmatprep.subr.bf16.mxu0 0
    %661 = vmatpush1.bf16.msra.mxu0 %v494
    %662 = vmatprep.subr.bf16.mxu0 0
    %663 = vmatpush2.bf16.msra.mxu0 %v509
    %664 = vmatprep.subr.bf16.mxu0 0
    %665 = vmatpush2.bf16.msra.mxu0 %v508
    %666 = vmatprep.subr.bf16.mxu0 0
    %667 = vmatpush2.bf16.msra.mxu0 %v507
    %668 = vmatprep.subr.bf16.mxu0 0
    %669 = vmatpush2.bf16.msra.mxu0 %v506
    %670 = vmatprep.subr.bf16.mxu0 0
    %671 = vmatpush2.bf16.msra.mxu0 %v505
    %672 = vmatprep.subr.bf16.mxu0 0
    %673 = vmatpush2.bf16.msra.mxu0 %v504
    %674 = vmatprep.subr.bf16.mxu0 0
    %675 = vmatpush2.bf16.msra.mxu0 %v503
    %676 = vmatprep.subr.bf16.mxu0 0
    %677 = vmatpush2.bf16.msra.mxu0 %v502
    %678 = vmatprep.mubr.bf16.mxu0 %v82
    %679 = vmatmul.mubr.bf16.gmra.mxu0 %v81
    %v680 = vpop.f32.mrf.mxu0
    %v681 = vadd.f32 %v641, %v680
    %v682 = vpop.f32.mrf.mxu0
    %v683 = vpop.f32.mrf.mxu0
    %v684 = vpop.f32.mrf.mxu0
    %685 = vdwg.mxu0
    %686 = vmatprep.subr.bf16.mxu0 0
    %687 = vmatpush1.bf16.msra.mxu0 %v517
    %688 = vmatprep.subr.bf16.mxu0 0
    %689 = vmatpush1.bf16.msra.mxu0 %v516
    %690 = vmatprep.subr.bf16.mxu0 0
    %691 = vmatpush1.bf16.msra.mxu0 %v515
    %692 = vmatprep.subr.bf16.mxu0 0
    %693 = vmatpush1.bf16.msra.mxu0 %v514
    %694 = vmatprep.subr.bf16.mxu0 0
    %695 = vmatpush1.bf16.msra.mxu0 %v513
    %696 = vmatprep.subr.bf16.mxu0 0
    %697 = vmatpush1.bf16.msra.mxu0 %v512
    %698 = vmatprep.subr.bf16.mxu0 0
    %699 = vmatpush1.bf16.msra.mxu0 %v511
    %700 = vmatprep.subr.bf16.mxu0 0
    %701 = vmatpush1.bf16.msra.mxu0 %v510
    %702 = vmatprep.subr.bf16.mxu0 0
    %703 = vmatpush2.bf16.msra.mxu0 %v525
    %704 = vmatprep.subr.bf16.mxu0 0
    %705 = vmatpush2.bf16.msra.mxu0 %v524
    %706 = vmatprep.subr.bf16.mxu0 0
    %707 = vmatpush2.bf16.msra.mxu0 %v523
    %708 = vmatprep.subr.bf16.mxu0 0
    %709 = vmatpush2.bf16.msra.mxu0 %v522
    %710 = vmatprep.subr.bf16.mxu0 0
    %711 = vmatpush2.bf16.msra.mxu0 %v521
    %712 = vmatprep.subr.bf16.mxu0 0
    %713 = vmatpush2.bf16.msra.mxu0 %v520
    %714 = vmatprep.subr.bf16.mxu0 0
    %715 = vmatpush2.bf16.msra.mxu0 %v519
    %716 = vmatprep.subr.bf16.mxu0 0
    %717 = vmatpush2.bf16.msra.mxu0 %v518
    %718 = vmatprep.mubr.bf16.mxu0 %v84
    %719 = vmatmul.mubr.bf16.gmra.mxu0 %v83
    %v720 = vpop.f32.mrf.mxu0
    %v721 = vadd.f32 %v681, %v720
    %v722 = vpop.f32.mrf.mxu0
    %v723 = vpop.f32.mrf.mxu0
    %v724 = vpop.f32.mrf.mxu0
    %725 = vdwg.mxu0
    %726 = vmatprep.subr.bf16.mxu0 0
    %727 = vmatpush1.bf16.msra.mxu0 %v533
    %728 = vmatprep.subr.bf16.mxu0 0
    %729 = vmatpush1.bf16.msra.mxu0 %v532
    %730 = vmatprep.subr.bf16.mxu0 0
    %731 = vmatpush1.bf16.msra.mxu0 %v531
    %732 = vmatprep.subr.bf16.mxu0 0
    %733 = vmatpush1.bf16.msra.mxu0 %v530
    %734 = vmatprep.subr.bf16.mxu0 0
    %735 = vmatpush1.bf16.msra.mxu0 %v529
    %736 = vmatprep.subr.bf16.mxu0 0
    %737 = vmatpush1.bf16.msra.mxu0 %v528
    %738 = vmatprep.subr.bf16.mxu0 0
    %739 = vmatpush1.bf16.msra.mxu0 %v527
    %740 = vmatprep.subr.bf16.mxu0 0
    %741 = vmatpush1.bf16.msra.mxu0 %v526
    %742 = vmatprep.subr.bf16.mxu0 0
    %743 = vmatpush2.bf16.msra.mxu0 %v541
    %744 = vmatprep.subr.bf16.mxu0 0
    %745 = vmatpush2.bf16.msra.mxu0 %v540
    %746 = vmatprep.subr.bf16.mxu0 0
    %747 = vmatpush2.bf16.msra.mxu0 %v539
    %748 = vmatprep.subr.bf16.mxu0 0
    %749 = vmatpush2.bf16.msra.mxu0 %v538
    %750 = vmatprep.subr.bf16.mxu0 0
    %751 = vmatpush2.bf16.msra.mxu0 %v537
    %752 = vmatprep.subr.bf16.mxu0 0
    %753 = vmatpush2.bf16.msra.mxu0 %v536
    %754 = vmatprep.subr.bf16.mxu0 0
    %755 = vmatpush2.bf16.msra.mxu0 %v535
    %756 = vmatprep.subr.bf16.mxu0 0
    %757 = vmatpush2.bf16.msra.mxu0 %v534
    %758 = vmatprep.mubr.bf16.mxu0 %v86
    %759 = vmatmul.mubr.bf16.gmra.mxu0 %v85
    %v760 = vpop.f32.mrf.mxu0
    %v761 = vadd.f32 %v721, %v760
    %v762 = vpop.f32.mrf.mxu0
    %v763 = vpop.f32.mrf.mxu0
    %v764 = vpop.f32.mrf.mxu0
    %765 = vdwg.mxu0
    %v766 = vpack.c.bf16 %v761, %v761
    %767 = vst [vmem:[#allocation5] sm:$0x1] %v766
    %vm768 = vcmask 1041408
    %v769 = vsel %vm768, %v761, -inf
    %770 = vmax.xlane.f32.xlu0 %v769
    %v771 = vpop.xlane.xlu0 %770
    %v772 = vsub.f32 %v761, %v771
    %v773 = vmul.f32 %v772, 1.442695
    %v774 = vpow.pop %v773
    %v775 = vsel %vm768, %v774, 0.0
    %776 = vadd.xlane.f32.xlu0 %v775
    %v777 = vpop.xlane.xlu0 %776
    %v778 = vrcp.pop %v777
    %v779 = vmul.f32 %v774, %v778
    %v780 = vpack.c.bf16 %v779, %v779
    %781 = vst [vmem:[#allocation6] sm:$0x1] %v780
    // Predicated region
    $region18: #{classifier_forward.1} parent=1 // pred_check
      _
    $region19: #{classifier_forward.1} parent=1 // pred_check_branch
      %783 = sbr.rel (0) target = $region21
    $region20: #{classifier_forward.1} parent=1 // pred_region
      %s785 = ssub.s32 16, 16
      %786 = vsyncadd [#allocation4], %s785
      %s788 = sshll.u32 [#allocation5], 4
      %s789 = int_to_ptr.vmem [resolvable:$true] %s788
      %791 = dma.vmem_to_hbm [thread:$0]  %s789, 16, %s3, [#allocation4]
    $region21: #{classifier_forward.1} parent=1 // pred_fallthru
      _
    // Predicated region
    $region22: #{classifier_forward.1} parent=1 // pred_check
      _
    $region23: #{classifier_forward.1} parent=1 // pred_check_branch
      %793 = sbr.rel (0) target = $region25
    $region24: #{classifier_forward.1} parent=1 // pred_region
      %s795 = ssub.s32 16, 16
      %796 = vsyncadd [#allocation7], %s795
      %s798 = sshll.u32 [#allocation6], 4
      %s799 = int_to_ptr.vmem [resolvable:$true] %s798
      %801 = dma.vmem_to_hbm [thread:$0]  %s799, 16, %s4, [#allocation7]
    $region25: #{classifier_forward.1} parent=1 // pred_fallthru
      _
    // Predicated region
    $region26: #{classifier_forward.1} parent=1 // pred_check
      _
    $region27: #{classifier_forward.1} parent=1 // pred_check_branch
      %803 = sbr.rel (0) target = $region29
    $region28: #{classifier_forward.1} parent=1 // pred_region
      %804 = dma.done [#allocation4], 16
    $region29: #{classifier_forward.1} parent=1 // pred_fallthru
      _
    // Predicated region
    $region30: #{classifier_forward.1} parent=1 // pred_check
      _
    $region31: #{classifier_forward.1} parent=1 // pred_check_branch
      %806 = sbr.rel (0) target = $region33
    $region32: #{classifier_forward.1} parent=1 // pred_region
      %807 = dma.done [#allocation7], 16
    $region33: #{classifier_forward.1} parent=1 // pred_fallthru
      _
    %808 = vsyncpa [#allocation3], 1
    %809 = vsyncpa [#allocation4], 1
    %810 = vsyncpa [#allocation7], 1

</llo_original>
